<compile_context>
chip_gen: v7x
topology: tpu7x:2x2x1
jax: 0.10.0
libtpu: 0.0.40
codegen_flags: <defaults>
</compile_context>

<pallas_src>
import jax
import jax.numpy as jnp
from jax.experimental import pallas as pl
from jax.experimental.pallas import tpu as pltpu


_PER_BUFFER_BUDGET_BYTES = 4 * 1024 * 1024   # soft per-buffer VMEM budget
_VMEM_LIMIT_BYTES = 32 * 1024 * 1024         # explicit scoped-VMEM limit (safe on v5e/v6e/v7x)
_FAST_PATH_BYTES = 256 * 1024                # below this, plain XLA add beats pallas_call overhead


def _pos_embed_kernel(x_ref, emb_ref, o_ref):
    # x_ref:   (TB, T)  activation tile (lane-dense, flattened S*D axis)
    # emb_ref: (1,  T)  pre-summed positional embedding tile (broadcast over TB)
    # o_ref:   (TB, T)
    o_ref[...] = x_ref[...] + emb_ref[...]


def _num_tensorcores():
    """Best-effort TensorCores-per-chip query (2 on v7x, 1 on v5e/v6e)."""
    try:
        info = pltpu.get_tpu_info()
    except Exception:
        return 1
    for attr in ("num_cores", "core_count", "num_tensorcores", "tensorcores_per_chip"):
        v = getattr(info, attr, None)
        if isinstance(v, int) and v > 0:
            return v
    return 1


def _choose_tiles(b, n, itemsize, budget, num_tc):
    """Pick (tb, t) block dims for the flattened (b, n) problem.

    Legality: sublane tile tb must be a multiple of 8 or equal b; lane tile t
    must be a multiple of 128 or equal n.  Ragged edges are handled by cdiv
    grids (Pallas masks partial blocks), so t need not divide n exactly.
    Each chosen block stays within `budget` bytes.
    """
    base_rows = b if b < 8 else 8                      # smallest legal sublane tile
    if base_rows * n * itemsize <= budget:
        t = n                                          # full rows fit the budget
    else:
        t = (budget // (base_rows * itemsize * 128)) * 128
        t = max(128, min(t, n))
    lane_steps = -(-n // t)                            # cdiv

    cap = max(base_rows, budget // max(1, t * itemsize))
    # On multi-TC chips ensure the parallel grid (lane x batch tiles) has at
    # least num_tc steps, but only shrink the batch tile if the lane axis
    # doesn't already provide them.
    if num_tc > 1 and lane_steps < num_tc and b >= num_tc:
        cap = min(cap, -(-b // num_tc))
    cap = min(cap, b)
    if cap >= b:
        tb = b
    else:
        tb = (cap // 8) * 8
        if tb < 8:                                     # no legal partial tile -> base tile
            tb = b if b < 8 else 8
    return tb, t


def pgm_positional_embedding(x, embedding, num_patterns, *,
                             force_pallas=False, donate_x=False):
    """x: (B, S, D), embedding: (1, S, D) with S = num_patterns + 8."""
    b, s, d = x.shape
    assert embedding.shape == (1, s, d)
    assert s == num_patterns + 8

    # Batch-invariant hoist: tiny (S, D) gather + add done once in the wrapper,
    # cast to the activation dtype so the kernel streams a single dtype.
    perm = jnp.asarray([0, 3, 6, 1, 4, 7, 2, 5] + list(range(8, 8 + num_patterns)),
                       dtype=jnp.int32)
    emb_sum = (embedding + embedding[:, perm, :]).astype(x.dtype)   # (1, S, D)
    # TODO(synk): PyTorch would promote bf16 x + f32 embedding to f32; keeping
    # x.dtype is a deliberate memory-traffic choice.

    itemsize = jnp.dtype(x.dtype).itemsize
    total_bytes = b * s * d * itemsize

    # Tiny-tensor fast path: a fused XLA elementwise add is strictly faster
    # than a pallas_call launch for shapes this small.
    if not force_pallas and total_bytes < _FAST_PATH_BYTES:
        return x + emb_sum

    # Lane-dense 2D view: one contiguous (S*D)-wide row per batch element.
    n = s * d
    x2 = x.reshape(b, n)
    emb2 = emb_sum.reshape(1, n)

    tb, t = _choose_tiles(b, n, itemsize, _PER_BUFFER_BUDGET_BYTES, _num_tensorcores())
    lane_steps = pl.cdiv(n, t)
    batch_steps = pl.cdiv(b, tb)

    # Lane tiles OUTERMOST, batch innermost: the embedding block index is
    # constant across the inner axis, so its tile stays resident in VMEM.
    grid = (lane_steps, batch_steps)

    extra_kwargs = {}
    if donate_x:
        # Caller guarantees x is dead afterwards: reuse its HBM buffer.
        extra_kwargs["input_output_aliases"] = {0: 0}

    out2 = pl.pallas_call(
        _pos_embed_kernel,
        out_shape=jax.ShapeDtypeStruct((b, n), x.dtype),
        grid_spec=pltpu.PrefetchScalarGridSpec(
            num_scalar_prefetch=0,
            grid=grid,
            in_specs=[
                # x: (TB, T) tile.
                pl.BlockSpec((tb, t), lambda jt, ib: (ib, jt)),
                # pre-summed embedding: depends only on the outer lane axis
                # -> resident across the inner batch loop.
                pl.BlockSpec((1, t), lambda jt, ib: (0, jt)),
            ],
            out_specs=pl.BlockSpec((tb, t), lambda jt, ib: (ib, jt)),
        ),
        compiler_params=pltpu.CompilerParams(
            dimension_semantics=("parallel", "parallel"),
            vmem_limit_bytes=_VMEM_LIMIT_BYTES),
        cost_estimate=pl.CostEstimate(
            flops=b * n,
            transcendentals=0,
            bytes_accessed=(2 * b * n + n) * itemsize),
        **extra_kwargs,
    )(x2, emb2)
    return out2.reshape(b, s, d)


def reference(x, embedding, num_patterns):
    perm = jnp.asarray([0, 3, 6, 1, 4, 7, 2, 5] + list(range(8, 8 + num_patterns)))
    emb = embedding + embedding[:, perm, :]
    return x + emb


if __name__ == "__main__":
    num_patterns = 8
    dim = 128
    batch = 2
    seq = num_patterns + 8  # 16

    key = jax.random.PRNGKey(0)
    k_emb, k_x = jax.random.split(key)
    # Deterministic parameter init (module uses torch.randn -> standard normal).
    embedding = jax.random.normal(k_emb, (1, seq, dim), dtype=jnp.float32)
    x = jax.random.normal(k_x, (batch, seq, dim), dtype=jnp.float32)

    ref = reference(x, embedding, num_patterns)

    # Pallas path (forced: the demo tensors are below the fast-path threshold).
    out = pgm_positional_embedding(x, embedding, num_patterns, force_pallas=True)
    out = jax.block_until_ready(out)
    assert out.shape == (batch, seq, dim)
    assert jnp.allclose(out, ref, atol=1e-6, rtol=1e-6)

    # Default wrapper path (tiny-tensor fast path) must match as well.
    out_fast = jax.block_until_ready(
        pgm_positional_embedding(x, embedding, num_patterns))
    assert jnp.allclose(out_fast, ref, atol=1e-6, rtol=1e-6)

    print("KERNEL_OK")
</pallas_src>

<mosaic_0001>
module attributes {stable_mosaic.version = 11 : i64} {
  func.func @_pos_embed_kernel(%arg0: i32, %arg1: i32, %arg2: memref<2x2048xf32, #tpu.memory_space<vmem>>, %arg3: memref<1x2048xf32, #tpu.memory_space<vmem>>, %arg4: memref<2x2048xf32, #tpu.memory_space<vmem>>) attributes {dimension_semantics = [#tpu.dimension_semantics<parallel>, #tpu.dimension_semantics<parallel>], iteration_bounds = array<i64: 1, 1>, scalar_prefetch = 0 : i64, scratch_operands = 0 : i64, tpu.core_type = #tpu.core_type<tc>, window_params = [{transform_indices = @transform_0, window_bounds = array<i64: 2, 2048>}, {transform_indices = @transform_1, window_bounds = array<i64: 1, 2048>}, {transform_indices = @transform_2, window_bounds = array<i64: 2, 2048>}]} {
    %c0 = arith.constant 0 : index
    %c0_0 = arith.constant 0 : index
    %0 = vector.load %arg2[%c0, %c0_0] : memref<2x2048xf32, #tpu.memory_space<vmem>>, vector<2x2048xf32>
    %c0_1 = arith.constant 0 : index
    %c0_2 = arith.constant 0 : index
    %1 = vector.load %arg3[%c0_1, %c0_2] : memref<1x2048xf32, #tpu.memory_space<vmem>>, vector<1x2048xf32>
    %2 = vector.broadcast %1 : vector<1x2048xf32> to vector<2x2048xf32>
    %3 = arith.addf %0, %2 : vector<2x2048xf32>
    %c0_3 = arith.constant 0 : index
    %c0_4 = arith.constant 0 : index
    %4 = vector.load %arg4[%c0_3, %c0_4] : memref<2x2048xf32, #tpu.memory_space<vmem>>, vector<2x2048xf32>
    tpu.vector_store %arg4[%c0_3, %c0_4], %3 {strides = array<i32>} : memref<2x2048xf32, #tpu.memory_space<vmem>>, vector<2x2048xf32>,
    return
  }
  func.func @transform_0(%arg0: i32, %arg1: i32) -> (i32, i32) {
    %c0_i32 = arith.constant 0 : i32
    return %arg1, %arg0 : i32, i32
  }
  func.func @transform_1(%arg0: i32, %arg1: i32) -> (i32, i32) {
    %c0_i32 = arith.constant 0 : i32
    %c0_i32_0 = arith.constant 0 : i32
    return %c0_i32, %arg0 : i32, i32
  }
  func.func @transform_2(%arg0: i32, %arg1: i32) -> (i32, i32) {
    %c0_i32 = arith.constant 0 : i32
    return %arg1, %arg0 : i32, i32
  }
}

</mosaic_0001>

<llo_original>
// kernel: tpu_custom_call.1
$region0: #{tpu_custom_call.1}
  #allocation0 [shape = 'u32[]', space=smem, size = 0x4, offset = 0x4, fixed_abs, tag = 'smem constant byte address 0x4 - core index']
  #allocation1 [shape = 'u32[144,128]{1,0:T(1,128)}', space=vmem, size = 0x12000, scoped, tag = 'internal scratch']
  %s0 = inlined_call_operand.hbm [shape: f32[2,2048], index: 0, kind: input, shape index: {}]
  %s1 = inlined_call_operand.hbm [shape: f32[1,2048], index: 1, kind: input, shape index: {}]
  %s2 = inlined_call_operand.hbm [shape: f32[2,2048], index: 2, kind: output, shape index: {}]
  %s3 = sld [smem:[#allocation0]]
  $region26: #{tpu_custom_call.1} parent=0
    _
  %s5 = ssub.s32 1, %s3
  %s6 = scalar_select 0, %s5, %s3
  $region1: #{tpu_custom_call.1} parent=0
    #allocation2 [shape = 'u8[16384]{0}', space=vmem, size = 0x4000, scoped, tag = 'input window, operand 0, single buffered']
    #allocation3 [shape = 's32[1]{0}', space=sflag, size = 0x4, scoped, tag = 'scoped memory for tpu_custom_call.1']
    #allocation4 [shape = 's32[1]{0}', space=sflag, size = 0x4, scoped, tag = 'scoped memory for tpu_custom_call.1']
    #allocation5 [shape = 'u8[8192]{0}', space=vmem, size = 0x2000, scoped, tag = 'input window, operand 1, single buffered']
    #allocation6 [shape = 's32[1]{0}', space=sflag, size = 0x4, scoped, tag = 'scoped memory for tpu_custom_call.1']
    #allocation7 [shape = 'u8[16384]{0}', space=vmem, size = 0x4000, scoped, tag = 'output window, operand 0, single buffered']
    %7 = vsyncpa [#allocation3], 0
    %8 = vsyncpa [#allocation6], 0
    %9 = vsyncpa [#allocation4], 0
    // Predicated region
    $region2: #{tpu_custom_call.1} parent=1 // pred_check
      _
    $region3: #{tpu_custom_call.1} parent=1 // pred_check_branch
      %11 = sbr.rel (0) target = $region5
    $region4: #{tpu_custom_call.1} parent=1 // pred_region
      %s13 = ssub.s32 512, 512
      %14 = vsyncadd [#allocation3], %s13
      %s16 = sshll.u32 [#allocation2], 4
      %s17 = int_to_ptr.vmem [resolvable:$true] %s16
      %19 = dma.hbm_to_vmem [thread:$0]  %s0, 512, %s17, [#allocation3]
    $region5: #{tpu_custom_call.1} parent=1 // pred_fallthru
      _
    // Predicated region
    $region6: #{tpu_custom_call.1} parent=1 // pred_check
      _
    $region7: #{tpu_custom_call.1} parent=1 // pred_check_branch
      %21 = sbr.rel (0) target = $region9
    $region8: #{tpu_custom_call.1} parent=1 // pred_region
      %s23 = ssub.s32 256, 256
      %24 = vsyncadd [#allocation6], %s23
      %s26 = sshll.u32 [#allocation5], 4
      %s27 = int_to_ptr.vmem [resolvable:$true] %s26
      %29 = dma.hbm_to_vmem [thread:$0]  %s1, 256, %s27, [#allocation6]
    $region9: #{tpu_custom_call.1} parent=1 // pred_fallthru
      _
    // Predicated region
    $region10: #{tpu_custom_call.1} parent=1 // pred_check
      _
    $region11: #{tpu_custom_call.1} parent=1 // pred_check_branch
      %31 = sbr.rel (0) target = $region13
    $region12: #{tpu_custom_call.1} parent=1 // pred_region
      %32 = dma.done [#allocation3], 512
    $region13: #{tpu_custom_call.1} parent=1 // pred_fallthru
      _
    // Predicated region
    $region14: #{tpu_custom_call.1} parent=1 // pred_check
      _
    $region15: #{tpu_custom_call.1} parent=1 // pred_check_branch
      %34 = sbr.rel (0) target = $region17
    $region16: #{tpu_custom_call.1} parent=1 // pred_region
      %35 = dma.done [#allocation6], 256
    $region17: #{tpu_custom_call.1} parent=1 // pred_fallthru
      _
    %v36 = vld [vmem:[#allocation2] sm:$0xff]
    %v37 = vld [vmem:[#allocation2 + $0x8] sm:$0xff]
    %v38 = vld [vmem:[#allocation2 + $0x10] sm:$0xff]
    %v39 = vld [vmem:[#allocation2 + $0x18] sm:$0xff]
    %v40 = vld [vmem:[#allocation5] sm:$0xff]
    %v41 = vld [vmem:[#allocation5 + $0x8] sm:$0xff]
    %v44 = vlaneseq
    %v45 = vshrl.u32 %v44, 7
    %v46 = vsub.s32 0, %v45
    %v47 = vrot.slane %v40, %v46
    %v48 = vlaneseq
    %v49 = vshrl.u32 %v48, 7
    %v50 = vsub.s32 1, %v49
    %v51 = vrot.slane %v40, %v50
    %v52 = vlaneseq
    %v53 = vshrl.u32 %v52, 7
    %v54 = vsub.s32 2, %v53
    %v55 = vrot.slane %v40, %v54
    %v56 = vlaneseq
    %v57 = vshrl.u32 %v56, 7
    %v58 = vsub.s32 3, %v57
    %v59 = vrot.slane %v40, %v58
    %v60 = vlaneseq
    %v61 = vshrl.u32 %v60, 7
    %v62 = vsub.s32 4, %v61
    %v63 = vrot.slane %v40, %v62
    %v64 = vlaneseq
    %v65 = vshrl.u32 %v64, 7
    %v66 = vsub.s32 5, %v65
    %v67 = vrot.slane %v40, %v66
    %v68 = vlaneseq
    %v69 = vshrl.u32 %v68, 7
    %v70 = vsub.s32 6, %v69
    %v71 = vrot.slane %v40, %v70
    %v72 = vlaneseq
    %v73 = vshrl.u32 %v72, 7
    %v74 = vsub.s32 7, %v73
    %v75 = vrot.slane %v40, %v74
    %v76 = vlaneseq
    %v77 = vshrl.u32 %v76, 7
    %v78 = vsub.s32 0, %v77
    %v79 = vrot.slane %v41, %v78
    %v80 = vlaneseq
    %v81 = vshrl.u32 %v80, 7
    %v82 = vsub.s32 1, %v81
    %v83 = vrot.slane %v41, %v82
    %v84 = vlaneseq
    %v85 = vshrl.u32 %v84, 7
    %v86 = vsub.s32 2, %v85
    %v87 = vrot.slane %v41, %v86
    %v88 = vlaneseq
    %v89 = vshrl.u32 %v88, 7
    %v90 = vsub.s32 3, %v89
    %v91 = vrot.slane %v41, %v90
    %v92 = vlaneseq
    %v93 = vshrl.u32 %v92, 7
    %v94 = vsub.s32 4, %v93
    %v95 = vrot.slane %v41, %v94
    %v96 = vlaneseq
    %v97 = vshrl.u32 %v96, 7
    %v98 = vsub.s32 5, %v97
    %v99 = vrot.slane %v41, %v98
    %v100 = vlaneseq
    %v101 = vshrl.u32 %v100, 7
    %v102 = vsub.s32 6, %v101
    %v103 = vrot.slane %v41, %v102
    %v104 = vlaneseq
    %v105 = vshrl.u32 %v104, 7
    %v106 = vsub.s32 7, %v105
    %v107 = vrot.slane %v41, %v106
    %v108 = vcombine.low %v47, %v51
    %v109 = vcombine.low %v55, %v59
    %v111 = vunpack.c.l.s4 1983009808
    %v112 = vunpack.c.0.s8 %v111
    %v113 = vlaneseq
    %v114 = vshrl.u32 %v113, 7
    %v115 = vsub.s32 %v112, %v114
    %v116 = vrot.slane %v108, %v115
    %v118 = vunpack.c.l.s4 1983009808
    %v119 = vunpack.c.0.s8 %v118
    %v120 = vlaneseq
    %v121 = vshrl.u32 %v120, 7
    %v122 = vsub.s32 %v119, %v121
    %v123 = vrot.slane %v109, %v122
    %v124 = vcombine.low %v116, %v123
    %v125 = vcombine.low %v63, %v67
    %v126 = vcombine.low %v71, %v75
    %v128 = vunpack.c.l.s4 1983009808
    %v129 = vunpack.c.0.s8 %v128
    %v130 = vlaneseq
    %v131 = vshrl.u32 %v130, 7
    %v132 = vsub.s32 %v129, %v131
    %v133 = vrot.slane %v125, %v132
    %v135 = vunpack.c.l.s4 1983009808
    %v136 = vunpack.c.0.s8 %v135
    %v137 = vlaneseq
    %v138 = vshrl.u32 %v137, 7
    %v139 = vsub.s32 %v136, %v138
    %v140 = vrot.slane %v126, %v139
    %v141 = vcombine.low %v133, %v140
    %v142 = vcombine.low %v79, %v83
    %v143 = vcombine.low %v87, %v91
    %v145 = vunpack.c.l.s4 1983009808
    %v146 = vunpack.c.0.s8 %v145
    %v147 = vlaneseq
    %v148 = vshrl.u32 %v147, 7
    %v149 = vsub.s32 %v146, %v148
    %v150 = vrot.slane %v142, %v149
    %v152 = vunpack.c.l.s4 1983009808
    %v153 = vunpack.c.0.s8 %v152
    %v154 = vlaneseq
    %v155 = vshrl.u32 %v154, 7
    %v156 = vsub.s32 %v153, %v155
    %v157 = vrot.slane %v143, %v156
    %v158 = vcombine.low %v150, %v157
    %v159 = vcombine.low %v95, %v99
    %v160 = vcombine.low %v103, %v107
    %v162 = vunpack.c.l.s4 1983009808
    %v163 = vunpack.c.0.s8 %v162
    %v164 = vlaneseq
    %v165 = vshrl.u32 %v164, 7
    %v166 = vsub.s32 %v163, %v165
    %v167 = vrot.slane %v159, %v166
    %v169 = vunpack.c.l.s4 1983009808
    %v170 = vunpack.c.0.s8 %v169
    %v171 = vlaneseq
    %v172 = vshrl.u32 %v171, 7
    %v173 = vsub.s32 %v170, %v172
    %v174 = vrot.slane %v160, %v173
    %v175 = vcombine.low %v167, %v174
    %v180 = vadd.f32 %v36, %v124
    %v181 = vadd.f32 %v37, %v141
    %v182 = vadd.f32 %v38, %v158
    %v183 = vadd.f32 %v39, %v175
    %184 = vst [vmem:[#allocation7] sm:$0xff] %v180
    %185 = vst [vmem:[#allocation7 + $0x8] sm:$0xff] %v181
    %186 = vst [vmem:[#allocation7 + $0x10] sm:$0xff] %v182
    %187 = vst [vmem:[#allocation7 + $0x18] sm:$0xff] %v183
    // Predicated region
    $region18: #{tpu_custom_call.1} parent=1 // pred_check
      _
    $region19: #{tpu_custom_call.1} parent=1 // pred_check_branch
      %189 = sbr.rel (0) target = $region21
    $region20: #{tpu_custom_call.1} parent=1 // pred_region
      %s191 = ssub.s32 512, 512
      %192 = vsyncadd [#allocation4], %s191
      %s194 = sshll.u32 [#allocation7], 4
      %s195 = int_to_ptr.vmem [resolvable:$true] %s194
      %197 = dma.vmem_to_hbm [thread:$0]  %s195, 512, %s2, [#allocation4]
    $region21: #{tpu_custom_call.1} parent=1 // pred_fallthru
      _
    // Predicated region
    $region22: #{tpu_custom_call.1} parent=1 // pred_check
      _
    $region23: #{tpu_custom_call.1} parent=1 // pred_check_branch
      %199 = sbr.rel (0) target = $region25
    $region24: #{tpu_custom_call.1} parent=1 // pred_region
      %200 = dma.done [#allocation4], 512
    $region25: #{tpu_custom_call.1} parent=1 // pred_fallthru
      _
    %201 = vsyncpa [#allocation3], 1
    %202 = vsyncpa [#allocation6], 1
    %203 = vsyncpa [#allocation4], 1

</llo_original>
